<compile_context>
chip_gen: v7x
topology: tpu7x:2x2x1
jax: 0.10.0
libtpu: 0.0.40
codegen_flags: <defaults>
</compile_context>

<pallas_src>
import jax
import jax.numpy as jnp
from jax.experimental import pallas as pl
from jax.experimental.pallas import tpu as pltpu


# ----------------------------------------------------------------------------
# Kernel
# ----------------------------------------------------------------------------
def _make_kernel(k, HW):
    """Kernel for a (Bt, C/k, k*HW) tile; group j of each folded row holds the
    spatial values of original channel cf*k + j."""
    inv_hw = 1.0 / float(HW)

    def kernel(x_ref, w1_ref, w2_ref, o_ref):
        # --- avg pool (per channel group), f32 accumulation ------------------
        # The f32 widening lives only inside each reduction; no full-tile f32
        # copy is held across the kernel.
        pooled = [
            jnp.sum(x_ref[:, :, j * HW:(j + 1) * HW].astype(jnp.float32), axis=-1)
            * inv_hw
            for j in range(k)
        ]  # k x (Bt, Cf)

        # --- fc1 (Linear C->C//16, no bias) + ReLU ---------------------------
        # Channels are grouped, so sum per-group partial matmuls.
        acc = jnp.dot(pooled[0], w1_ref[0], preferred_element_type=jnp.float32)
        for j in range(1, k):
            acc = acc + jnp.dot(pooled[j], w1_ref[j],
                                preferred_element_type=jnp.float32)
        h = jnp.maximum(acc, 0.0)  # (Bt, Cr)

        # --- fc2, sigmoid(2*fc), broadcast multiply, store -------------------
        for j in range(k):
            fc_j = jnp.dot(h, w2_ref[j], preferred_element_type=jnp.float32)  # (Bt, Cf)
            scale_j = jax.nn.sigmoid(fc_j + fc_j).astype(o_ref.dtype)
            o_ref[:, :, j * HW:(j + 1) * HW] = (
                x_ref[:, :, j * HW:(j + 1) * HW] * scale_j[:, :, None]
            )

    return kernel


# ----------------------------------------------------------------------------
# Tiling / VMEM planning
# ----------------------------------------------------------------------------
def _round_up(n, m):
    return -(-n // m) * m


def _padded2d_bytes(rows, cols, itemsize):
    # VMEM layout padding of the last two dims: (8, 128).
    return _round_up(max(rows, 1), 8) * _round_up(max(cols, 1), 128) * itemsize


def _pick_fold(C, HW):
    """Smallest k (dividing C) so the lane extent k*HW is a multiple of 128."""
    if HW % 128 == 0:
        return 1
    for k in (2, 4, 8, 16):
        if C % k == 0 and (k * HW) % 128 == 0:
            return k
    return 1  # fall back to masked stores; still correct


def _plan(B, Cf, Cr, Lf, k, itemsize):
    """Pick (batch_tile, vmem_limit_bytes) with explicit VMEM accounting."""
    try:
        cap = int(pltpu.get_tpu_info().vmem_capacity_bytes)
    except Exception:
        cap = 64 << 20  # conservative (v7x-sized) fallback
    vmem_limit = (64 << 20) if cap >= (96 << 20) else (40 << 20)

    # Double-buffered, lane-padded f32 weight blocks (constant across steps).
    w_bytes = 2 * k * (_padded2d_bytes(Cf, Cr, 4) + _padded2d_bytes(Cr, Cf, 4))
    headroom = 2 << 20
    per_b = _padded2d_bytes(Cf, Lf, itemsize)  # one batch row of the x / out tile

    bt_budget = (vmem_limit - w_bytes - headroom) // (4 * per_b)  # 2x(in)+2x(out)
    if bt_budget < 1:
        # A single batch element needs more scoped VMEM; grow toward capacity.
        vmem_limit = min(cap - (8 << 20), 4 * per_b + w_bytes + headroom)
        bt_budget = 1
        # TODO(synk): if a single (C, H*W) slab still exceeds VMEM, a two-pass
        # (pool+FC, then re-stream x) kernel is required; not implemented.

    bt_sweet = max(1, (8 << 20) // per_b)      # keep input tiles <= ~8 MiB
    min_steps = min(B, 8)                      # >= 8 pipelined steps when possible
    bt_steps = max(1, B // max(min_steps, 1))

    bt = int(max(1, min(B, bt_budget, bt_sweet, bt_steps)))
    return bt, int(vmem_limit)


# ----------------------------------------------------------------------------
# Wrapper
# ----------------------------------------------------------------------------
def cbam_channel_attention(x_nchw, w1, w2):
    """x_nchw: (B, C, H, W).  w1: fc1.weight (C//16, C).  w2: fc2.weight (C, C//16)."""
    B, C, H, W = x_nchw.shape
    HW = H * W
    Cr, Cin = w1.shape
    assert Cin == C and w2.shape == (C, Cr) and Cr >= 1

    out_dtype = x_nchw.dtype
    itemsize = jnp.dtype(out_dtype).itemsize

    # Fold k channels into the lane axis when HW is not 128-dense (free reshape).
    k = _pick_fold(C, HW)
    Cf = C // k
    Lf = k * HW
    x3 = x_nchw.reshape(B, Cf, Lf)

    # PyTorch Linear computes y = x @ W.T; pre-transpose and regroup the channel
    # axis so group j (lane slice j*HW:(j+1)*HW) sees its own contiguous weights.
    w1t = jnp.asarray(w1, jnp.float32).T  # (C, Cr)
    w2t = jnp.asarray(w2, jnp.float32).T  # (Cr, C)
    w1g = jnp.stack([w1t[j::k, :] for j in range(k)], axis=0)  # (k, Cf, Cr)
    w2g = jnp.stack([w2t[:, j::k] for j in range(k)], axis=0)  # (k, Cr, Cf)

    bt, vmem_limit = _plan(B, Cf, Cr, Lf, k, itemsize)
    grid_b = pl.cdiv(B, bt)

    out3 = pl.pallas_call(
        _make_kernel(k, HW),
        out_shape=jax.ShapeDtypeStruct((B, Cf, Lf), out_dtype),
        grid_spec=pltpu.PrefetchScalarGridSpec(
            num_scalar_prefetch=0,
            grid=(grid_b,),
            in_specs=[
                pl.BlockSpec((bt, Cf, Lf), lambda b: (b, 0, 0)),   # x tile
                pl.BlockSpec((k, Cf, Cr), lambda b: (0, 0, 0)),    # fc1 weights
                pl.BlockSpec((k, Cr, Cf), lambda b: (0, 0, 0)),    # fc2 weights
            ],
            out_specs=pl.BlockSpec((bt, Cf, Lf), lambda b: (b, 0, 0)),
        ),
        compiler_params=pltpu.CompilerParams(
            dimension_semantics=("parallel",),   # batch-parallel (v7x megacore)
            vmem_limit_bytes=vmem_limit,
        ),
    )(x3, w1g, w2g)

    return out3.reshape(B, C, H, W)


# ----------------------------------------------------------------------------
# Pure-JAX reference (matches the PyTorch forward exactly)
# ----------------------------------------------------------------------------
def cbam_channel_reference(x_nchw, w1, w2):
    x = x_nchw.astype(jnp.float32)
    avg = jnp.mean(x, axis=(2, 3))  # (B, C)
    h = jnp.maximum(avg @ jnp.asarray(w1, jnp.float32).T, 0.0)
    fc = h @ jnp.asarray(w2, jnp.float32).T
    scale = jax.nn.sigmoid(fc + fc)
    return x * scale[:, :, None, None]


if __name__ == "__main__":
    key = jax.random.PRNGKey(0)

    def run_case(case_id, B, C, H, W):
        Cr = C // 16  # channel must be >= 16, as in the PyTorch module
        kx, k1, k2 = jax.random.split(jax.random.fold_in(key, case_id), 3)
        x = jax.random.normal(kx, (B, C, H, W), dtype=jnp.float32)
        w1 = 0.1 * jax.random.normal(k1, (Cr, C), dtype=jnp.float32)  # fc1.weight
        w2 = 0.1 * jax.random.normal(k2, (C, Cr), dtype=jnp.float32)  # fc2.weight

        out = jax.block_until_ready(cbam_channel_attention(x, w1, w2))
        ref = cbam_channel_reference(x, w1, w2)
        assert out.shape == (B, C, H, W)
        assert jnp.allclose(out, ref, atol=1e-5, rtol=1e-5), "mismatch vs reference"

    run_case(0, 2, 32, 16, 16)   # HW=256: lane-dense as-is (k=1 path)
    run_case(1, 2, 32, 8, 8)     # HW=64:  channel-fold lane-dense path (k=2)
    print("KERNEL_OK")
</pallas_src>

<mosaic_0001>
module attributes {stable_mosaic.version = 11 : i64} {
  func.func @kernel(%arg0: i32, %arg1: memref<1x32x256xf32, #tpu.memory_space<vmem>>, %arg2: memref<1x32x2xf32, #tpu.memory_space<vmem>>, %arg3: memref<1x2x32xf32, #tpu.memory_space<vmem>>, %arg4: memref<1x32x256xf32, #tpu.memory_space<vmem>>) attributes {dimension_semantics = [#tpu.dimension_semantics<parallel>], iteration_bounds = array<i64: 2>, scalar_prefetch = 0 : i64, scratch_operands = 0 : i64, tpu.core_type = #tpu.core_type<tc>, window_params = [{transform_indices = @transform_0, window_bounds = array<i64: 1, 32, 256>}, {pipeline_mode = #tpu.pipeline_mode<synchronous>, transform_indices = @transform_1, window_bounds = array<i64: 1, 32, 2>}, {pipeline_mode = #tpu.pipeline_mode<synchronous>, transform_indices = @transform_2, window_bounds = array<i64: 1, 2, 32>}, {transform_indices = @transform_3, window_bounds = array<i64: 1, 32, 256>}]} {
    %c0 = arith.constant 0 : index
    %c0_0 = arith.constant 0 : index
    %c0_1 = arith.constant 0 : index
    %0 = vector.load %arg1[%c0, %c0_0, %c0_1] : memref<1x32x256xf32, #tpu.memory_space<vmem>>, vector<1x32x256xf32>
    %cst = arith.constant dense<0.000000e+00> : vector<1x32xf32>
    %1 = vector.multi_reduction <add>, %0, %cst [2] : vector<1x32x256xf32> to vector<1x32xf32>
    %cst_2 = arith.constant 3.906250e-03 : f32
    %2 = vector.broadcast %cst_2 : f32 to vector<1x32xf32>
    %3 = arith.mulf %1, %2 : vector<1x32xf32>
    %c0_3 = arith.constant 0 : index
    %c0_4 = arith.constant 0 : index
    %c0_5 = arith.constant 0 : index
    %4 = vector.load %arg2[%c0_3, %c0_4, %c0_5] : memref<1x32x2xf32, #tpu.memory_space<vmem>>, vector<1x32x2xf32>
    %5 = vector.shape_cast %4 : vector<1x32x2xf32> to vector<32x2xf32>
    %cst_6 = arith.constant dense<0.000000e+00> : vector<1x2xf32>
    %6 = tpu.matmul %3, %5, %cst_6 {dimension_numbers = #tpu.dot_dimension_numbers<[1], [0], [0], [1], [0, 0, 1, 1], [], []>} : vector<1x32xf32>, vector<32x2xf32>, vector<1x2xf32> -> vector<1x2xf32>
    %cst_7 = arith.constant 0.000000e+00 : f32
    %7 = vector.broadcast %cst_7 : f32 to vector<1x2xf32>
    %8 = arith.maximumf %6, %7 : vector<1x2xf32>
    %c0_8 = arith.constant 0 : index
    %c0_9 = arith.constant 0 : index
    %c0_10 = arith.constant 0 : index
    %9 = vector.load %arg3[%c0_8, %c0_9, %c0_10] : memref<1x2x32xf32, #tpu.memory_space<vmem>>, vector<1x2x32xf32>
    %10 = vector.shape_cast %9 : vector<1x2x32xf32> to vector<2x32xf32>
    %cst_11 = arith.constant dense<0.000000e+00> : vector<1x32xf32>
    %11 = tpu.matmul %8, %10, %cst_11 {dimension_numbers = #tpu.dot_dimension_numbers<[1], [0], [0], [1], [0, 0, 1, 1], [], []>} : vector<1x2xf32>, vector<2x32xf32>, vector<1x32xf32> -> vector<1x32xf32>
    %12 = arith.addf %11, %11 : vector<1x32xf32>
    %13 = arith.negf %12 : vector<1x32xf32>
    %14 = math.exp %13 : vector<1x32xf32>
    %cst_12 = arith.constant 1.000000e+00 : f32
    %15 = vector.broadcast %cst_12 : f32 to vector<1x32xf32>
    %16 = arith.addf %15, %14 : vector<1x32xf32>
    %17 = arith.divf %15, %16 : vector<1x32xf32>
    %c0_13 = arith.constant 0 : index
    %c0_14 = arith.constant 0 : index
    %c0_15 = arith.constant 0 : index
    %18 = vector.load %arg1[%c0_13, %c0_14, %c0_15] : memref<1x32x256xf32, #tpu.memory_space<vmem>>, vector<1x32x256xf32>
    %19 = vector.shape_cast %17 : vector<1x32xf32> to vector<1x32x1xf32>
    %20 = vector.broadcast %19 : vector<1x32x1xf32> to vector<1x32x256xf32>
    %21 = arith.mulf %18, %20 : vector<1x32x256xf32>
    %c0_16 = arith.constant 0 : index
    %c0_17 = arith.constant 0 : index
    %c0_18 = arith.constant 0 : index
    %22 = vector.load %arg4[%c0_16, %c0_17, %c0_18] : memref<1x32x256xf32, #tpu.memory_space<vmem>>, vector<1x32x256xf32>
    tpu.vector_store %arg4[%c0_16, %c0_17, %c0_18], %21 {strides = array<i32>} : memref<1x32x256xf32, #tpu.memory_space<vmem>>, vector<1x32x256xf32>,
    return
  }
  func.func @transform_0(%arg0: i32) -> (i32, i32, i32) {
    %c0_i32 = arith.constant 0 : i32
    %c0_i32_0 = arith.constant 0 : i32
    %c0_i32_1 = arith.constant 0 : i32
    return %arg0, %c0_i32, %c0_i32_0 : i32, i32, i32
  }
  func.func @transform_1(%arg0: i32) -> (i32, i32, i32) {
    %c0_i32 = arith.constant 0 : i32
    %c0_i32_0 = arith.constant 0 : i32
    %c0_i32_1 = arith.constant 0 : i32
    %c0_i32_2 = arith.constant 0 : i32
    return %c0_i32, %c0_i32_0, %c0_i32_1 : i32, i32, i32
  }
  func.func @transform_2(%arg0: i32) -> (i32, i32, i32) {
    %c0_i32 = arith.constant 0 : i32
    %c0_i32_0 = arith.constant 0 : i32
    %c0_i32_1 = arith.constant 0 : i32
    %c0_i32_2 = arith.constant 0 : i32
    return %c0_i32, %c0_i32_0, %c0_i32_1 : i32, i32, i32
  }
  func.func @transform_3(%arg0: i32) -> (i32, i32, i32) {
    %c0_i32 = arith.constant 0 : i32
    %c0_i32_0 = arith.constant 0 : i32
    %c0_i32_1 = arith.constant 0 : i32
    return %arg0, %c0_i32, %c0_i32_0 : i32, i32, i32
  }
}

</mosaic_0001>

<llo_original>
// kernel: tpu_custom_call.1
$region0: #{tpu_custom_call.1}
  #allocation0 [shape = 'u32[]', space=smem, size = 0x4, offset = 0x4, fixed_abs, tag = 'smem constant byte address 0x4 - core index']
  #allocation1 [shape = 'u32[144,128]{1,0:T(1,128)}', space=vmem, size = 0x12000, scoped, tag = 'internal scratch']
  %s0 = inlined_call_operand.hbm [shape: f32[2,32,256], index: 0, kind: input, shape index: {}]
  %s1 = inlined_call_operand.vmem [shape: f32[1,32,2], index: 1, kind: input, shape index: {}]
  %s2 = inlined_call_operand.vmem [shape: f32[1,2,32], index: 2, kind: input, shape index: {}]
  %s3 = inlined_call_operand.hbm [shape: f32[2,32,256], index: 3, kind: output, shape index: {}]
  %s4 = sld [smem:[#allocation0]]
  $region49: #{tpu_custom_call.1} parent=0
    _
  %s6 = ssub.s32 1, %s4
  %s7 = scalar_select 0, %s6, %s4
  $region1: #{tpu_custom_call.1} parent=0
    #allocation2 [shape = 'u8[65536]{0}', space=vmem, size = 0x10000, scoped, tag = 'input window, operand 0']
    #allocation3 [shape = 's32[2]{0}', space=sflag, size = 0x8, scoped, tag = 'scoped memory for tpu_custom_call.1']
    #allocation4 [shape = 's32[2]{0}', space=sflag, size = 0x8, scoped, tag = 'scoped memory for tpu_custom_call.1']
    #allocation5 [shape = 'u8[65536]{0}', space=vmem, size = 0x10000, scoped, tag = 'output window, operand 0']
    %8 = vsyncpa [#allocation3], 0
    %s9 = scalar_lea.sflag [#allocation3], 1
    %10 = vsyncpa %s9, 0
    %11 = vsyncpa [#allocation4], 0
    %s12 = scalar_lea.sflag [#allocation4], 1
    %13 = vsyncpa %s12, 0
    loop: start=0, step=1, limit=4
    $region2: #{tpu_custom_call.1} parent=1 // loop_pre_header
      _
    $region3: #{tpu_custom_call.1} parent=1 // loop_header
      %s15 = sphi 0, %s19
      %p16 = scmp.ge.s32.totalorder %s15, 4
      %s25 = sphi 0, %s27
      %s28 = sphi 0, %s25
      %s29 = sphi 0, %s28
      %s45 = sphi 0, %s29
      %s49 = sphi 0, %s49
      %s51 = sphi 0, %s49
      %s52 = sphi 0, %s51
      %s66 = sphi 0, %s52
      %s70 = sphi 0, %s70
      %s72 = sphi 0, %s70
      %s73 = sphi 0, %s72
      %s87 = sphi 0, %s73
      %s93 = sphi 0, %s95
      %s96 = sphi 0, %s93
      %s97 = sphi 0, %s96
      %s113 = sphi 0, %s97
    $region4: #{tpu_custom_call.1} parent=1 // loop_header_branch
      %18 = sbr.rel (%p16) target = $region8
    $region5: #{tpu_custom_call.1} parent=1 // loop_body
      %s20 = ssub.s32 %s15, 1
      %s21 = ssub.s32 %s15, 2
      %s22 = sadd.s32 %s15, 1
      %s23 = ssub.s32 %s15, %s22
      %p24 = scmp.eq.s32.totalorder %s23, 0
      %s26 = sadd.s32 %s25, 1
      %s27 = scalar_select %p24, %s25, %s26
      %p30 = pneg %p24
      %p31 = scmp.eq.s32.totalorder %s15, 1
      %p32 = por %p30, %p31
      %p33 = scmp.ne.s32.totalorder %s25, %s28
      %p34 = scmp.eq.s32.totalorder %s15, 0
      %p35 = por %p33, %p34
      %p36 = scmp.ne.s32.totalorder %s25, %s28
      %p37 = scmp.eq.s32.totalorder %s20, 1
      %p38 = por %p36, %p37
      %p39 = scmp.ne.s32.totalorder %s28, %s29
      %p40 = scmp.eq.s32.totalorder %s20, 0
      %p41 = por %p39, %p40
      %p42 = scmp.ne.s32.totalorder %s28, %s29
      %p43 = scmp.eq.s32.totalorder %s21, 1
      %p44 = por %p42, %p43
      %p46 = scmp.ne.s32.totalorder %s29, %s45
      %p47 = scmp.eq.s32.totalorder %s21, 0
      %p48 = por %p46, %p47
      %s50 = sadd.s32 %s49, 1
      %p53 = scmp.eq.s32.totalorder %s15, 1
      %p54 = scmp.ne.s32.totalorder %s49, %s51
      %p55 = scmp.eq.s32.totalorder %s15, 0
      %p56 = por %p54, %p55
      %p57 = scmp.ne.s32.totalorder %s49, %s51
      %p58 = scmp.eq.s32.totalorder %s20, 1
      %p59 = por %p57, %p58
      %p60 = scmp.ne.s32.totalorder %s51, %s52
      %p61 = scmp.eq.s32.totalorder %s20, 0
      %p62 = por %p60, %p61
      %p63 = scmp.ne.s32.totalorder %s51, %s52
      %p64 = scmp.eq.s32.totalorder %s21, 1
      %p65 = por %p63, %p64
      %p67 = scmp.ne.s32.totalorder %s52, %s66
      %p68 = scmp.eq.s32.totalorder %s21, 0
      %p69 = por %p67, %p68
      %s71 = sadd.s32 %s70, 1
      %p74 = scmp.eq.s32.totalorder %s15, 1
      %p75 = scmp.ne.s32.totalorder %s70, %s72
      %p76 = scmp.eq.s32.totalorder %s15, 0
      %p77 = por %p75, %p76
      %p78 = scmp.ne.s32.totalorder %s70, %s72
      %p79 = scmp.eq.s32.totalorder %s20, 1
      %p80 = por %p78, %p79
      %p81 = scmp.ne.s32.totalorder %s72, %s73
      %p82 = scmp.eq.s32.totalorder %s20, 0
      %p83 = por %p81, %p82
      %p84 = scmp.ne.s32.totalorder %s72, %s73
      %p85 = scmp.eq.s32.totalorder %s21, 1
      %p86 = por %p84, %p85
      %p88 = scmp.ne.s32.totalorder %s73, %s87
      %p89 = scmp.eq.s32.totalorder %s21, 0
      %p90 = por %p88, %p89
      %s91 = ssub.s32 %s15, %s22
      %p92 = scmp.eq.s32.totalorder %s91, 0
      %s94 = sadd.s32 %s93, 1
      %s95 = scalar_select %p92, %s93, %s94
      %p98 = pneg %p92
      %p99 = scmp.eq.s32.totalorder %s15, 1
      %p100 = por %p98, %p99
      %p101 = scmp.ne.s32.totalorder %s93, %s96
      %p102 = scmp.eq.s32.totalorder %s15, 0
      %p103 = por %p101, %p102
      %p104 = scmp.ne.s32.totalorder %s93, %s96
      %p105 = scmp.eq.s32.totalorder %s20, 1
      %p106 = por %p104, %p105
      %p107 = scmp.ne.s32.totalorder %s96, %s97
      %p108 = scmp.eq.s32.totalorder %s20, 0
      %p109 = por %p107, %p108
      %p110 = scmp.ne.s32.totalorder %s96, %s97
      %p111 = scmp.eq.s32.totalorder %s21, 1
      %p112 = por %p110, %p111
      %p114 = scmp.ne.s32.totalorder %s97, %s113
      %p115 = scmp.eq.s32.totalorder %s21, 0
      %p116 = por %p114, %p115
      %p117 = scmp.le.s32.totalorder 1, %s15
      %p118 = scmp.lt.s32.totalorder %s15, 3
      %p119 = pnand %p117, %p118
      %p120 = pneg %p119
      // Predicated region
      $region9: #{tpu_custom_call.1} parent=5 // pred_check
        _
      $region10: #{tpu_custom_call.1} parent=5 // pred_check_branch
        %122 = sbr.rel (%p119) target = $region12
      $region11: #{tpu_custom_call.1} parent=5 // pred_region
        %s123 = ssub.s32 %s15, 1
        // Predicated region
        $region13: #{tpu_custom_call.1} parent=11 // pred_check
          %p124 = pneg %p62
        $region14: #{tpu_custom_call.1} parent=11 // pred_check_branch
          %126 = sbr.rel (%p124) target = $region16
        $region15: #{tpu_custom_call.1} parent=11 // pred_region
          _
        $region16: #{tpu_custom_call.1} parent=11 // pred_fallthru
          _
        // Predicated region
        $region17: #{tpu_custom_call.1} parent=11 // pred_check
          %p127 = pneg %p83
        $region18: #{tpu_custom_call.1} parent=11 // pred_check_branch
          %129 = sbr.rel (%p127) target = $region20
        $region19: #{tpu_custom_call.1} parent=11 // pred_region
          _
        $region20: #{tpu_custom_call.1} parent=11 // pred_fallthru
          _
      $region12: #{tpu_custom_call.1} parent=5 // pred_fallthru
        _
      %p130 = scmp.lt.s32.totalorder %s15, 2
      // Predicated region
      $region21: #{tpu_custom_call.1} parent=5 // pred_check
        %p131 = pneg %p130
      $region22: #{tpu_custom_call.1} parent=5 // pred_check_branch
        %133 = sbr.rel (%p131) target = $region24
      $region23: #{tpu_custom_call.1} parent=5 // pred_region
        // Predicated region
        $region25: #{tpu_custom_call.1} parent=23 // pred_check
          %p134 = pneg %p35
        $region26: #{tpu_custom_call.1} parent=23 // pred_check_branch
          %136 = sbr.rel (%p134) target = $region28
        $region27: #{tpu_custom_call.1} parent=23 // pred_region
          %s137 = sand.u32 %s25, 1
          %s138 = scalar_lea.sflag [#allocation3], %s137
          %s139 = sand.u32 %s25, 1
          %s140 = smul.addr %s139, 64
          %s141 = scalar_lea.vmem [#allocation2], %s140
          %s143 = ssub.s32 1024, 1024
          %144 = vsyncadd %s138, %s143
          %s145 = smul.addr %s15, 8
          %s146 = smul.addr %s145, 128
          %s147 = scalar_lea.hbm %s0, %s146
          %s148 = sshll.u32 %s141, 4
          %s149 = int_to_ptr.vmem [resolvable:$true] %s148
          %154 = dma.hbm_to_vmem [thread:$0]  %s147, 1024, %s149, %s138, 256, 256, 16
        $region28: #{tpu_custom_call.1} parent=23 // pred_fallthru
          _
      $region24: #{tpu_custom_call.1} parent=5 // pred_fallthru
        _
      %p155 = scmp.le.s32.totalorder 1, %s15
      %p156 = scmp.lt.s32.totalorder %s15, 3
      %p157 = pnand %p155, %p156
      %p158 = pneg %p157
      // Predicated region
      $region29: #{tpu_custom_call.1} parent=5 // pred_check
        _
      $region30: #{tpu_custom_call.1} parent=5 // pred_check_branch
        %160 = sbr.rel (%p157) target = $region32
      $region31: #{tpu_custom_call.1} parent=5 // pred_region
        %s161 = ssub.s32 %s15, 1
        %s162 = sand.u32 %s28, 1
        %s163 = scalar_lea.sflag [#allocation3], %s162
        %s164 = sand.u32 %s28, 1
        %s165 = smul.addr %s164, 64
        %s166 = scalar_lea.vmem [#allocation2], %s165
        // Predicated region
        $region33: #{tpu_custom_call.1} parent=31 // pred_check
          %p167 = pneg %p41
        $region34: #{tpu_custom_call.1} parent=31 // pred_check_branch
          %169 = sbr.rel (%p167) target = $region36
        $region35: #{tpu_custom_call.1} parent=31 // pred_region
          %170 = dma.done %s163, 1024
        $region36: #{tpu_custom_call.1} parent=31 // pred_fallthru
          _
        %s171 = sand.u32 %s28, 1
        %s172 = scalar_lea.sflag [#allocation3], %s171
        %s173 = sand.u32 %s28, 1
        %s174 = smul.addr %s173, 64
        %s175 = scalar_lea.vmem [#allocation2], %s174
        %p176 = pneg %p41
        %p177 = pneg %p38
        %p178 = pneg %p62
        %p179 = pneg %p59
        %p180 = pneg %p83
        %p181 = pneg %p80
        %p182 = pneg %p109
        %p183 = pneg %p106
        %s184 = sand.u32 %s96, 1
        %s185 = scalar_lea.sflag [#allocation4], %s184
        %s186 = sand.u32 %s96, 1
        %s187 = smul.addr %s186, 64
        %s188 = scalar_lea.vmem [#allocation5], %s187
        %v189 = vld [vmem:[%s166] sm:$0xff]
        %v190 = vld [vmem:[%s166 + $0x8] sm:$0xff]
        %v191 = vld [vmem:[%s166 + $0x10] sm:$0xff]
        %v192 = vld [vmem:[%s166 + $0x18] sm:$0xff]
        %v193 = vld [vmem:[%s166 + $0x20] sm:$0xff]
        %v194 = vld [vmem:[%s166 + $0x28] sm:$0xff]
        %v195 = vld [vmem:[%s166 + $0x30] sm:$0xff]
        %v196 = vld [vmem:[%s166 + $0x38] sm:$0xff]
        %v197 = vadd.f32 %v189, %v190
        %198 = vadd.xlane.f32.xlu0 %v197
        %v199 = vpop.xlane.xlu0 %198
        %v200 = vadd.f32 %v191, %v192
        %201 = vadd.xlane.f32.xlu0 %v200
        %v202 = vpop.xlane.xlu0 %201
        %v203 = vadd.f32 %v193, %v194
        %204 = vadd.xlane.f32.xlu0 %v203
        %v205 = vpop.xlane.xlu0 %204
        %v206 = vadd.f32 %v195, %v196
        %207 = vadd.xlane.f32.xlu0 %v206
        %v208 = vpop.xlane.xlu0 %207
        %v209 = vmul.f32 %v199, 0.00390625
        %v210 = vmul.f32 %v202, 0.00390625
        %v211 = vmul.f32 %v205, 0.00390625
        %v212 = vmul.f32 %v208, 0.00390625
        %v213 = vld [vmem:[%s1] sm:$0xff]
        %v214 = vld [vmem:[%s1 + $0x8] sm:$0xff]
        %v215 = vld [vmem:[%s1 + $0x10] sm:$0xff]
        %v216 = vld [vmem:[%s1 + $0x18] sm:$0xff]
        %v221 = vlaneseq
        %v222 = vand.u32 %v221, 127
        %v223 = vlaneseq
        %v224 = vshrl.u32 %v223, 7
        %v225 = vsub.s32 %v222, %v224
        %v226 = vrot.slane %v209, %v225
        %v227 = vadd.s32 %v222, 4294967288
        %v228 = vlaneseq
        %v229 = vshrl.u32 %v228, 7
        %v230 = vsub.s32 %v227, %v229
        %v231 = vrot.slane %v210, %v230
        %vm232 = vcmask 130112
        %v233 = vsel %vm232, %v231, %v226
        %v234 = vadd.s32 %v222, 4294967280
        %v235 = vlaneseq
        %v236 = vshrl.u32 %v235, 7
        %v237 = vsub.s32 %v234, %v236
        %v238 = vrot.slane %v211, %v237
        %vm239 = vcmask 195712
        %v240 = vsel %vm239, %v238, %v233
        %v241 = vadd.s32 %v222, 4294967272
        %v242 = vlaneseq
        %v243 = vshrl.u32 %v242, 7
        %v244 = vsub.s32 %v241, %v243
        %v245 = vrot.slane %v212, %v244
        %vm246 = vcmask 261312
        %v247 = vsel %vm246, %v245, %v240
        %vm248 = vcmask 261120
        %v249 = vsel %vm248, %v247, 0
        %251 = vmatprep.subr.mxu0 0.0
        %252 = vmatpush1.msra.mxu0 %v213
        %253 = vmatprep.subr.mxu0 0.0
        %254 = vmatpush1.msra.mxu0 %v214
        %255 = vmatprep.subr.mxu0 0.0
        %256 = vmatpush1.msra.mxu0 %v215
        %257 = vmatprep.subr.mxu0 0.0
        %258 = vmatpush1.msra.mxu0 %v216
        %259 = vmatprep.subr.mxu0 0.0
        %260 = vmatpush1.msra.mxu0 0.0
        %261 = vmatprep.subr.mxu0 0.0
        %262 = vmatpush1.msra.mxu0 0.0
        %263 = vmatprep.subr.mxu0 0.0
        %264 = vmatpush1.msra.mxu0 0.0
        %265 = vmatprep.subr.mxu0 0.0
        %266 = vmatpush1.msra.mxu0 0.0
        %267 = vmatprep.subr.mxu0 0.0
        %268 = vmatpush1.msra.mxu0 0.0
        %269 = vmatprep.subr.mxu0 0.0
        %270 = vmatpush1.msra.mxu0 0.0
        %271 = vmatprep.subr.mxu0 0.0
        %272 = vmatpush1.msra.mxu0 0.0
        %273 = vmatprep.subr.mxu0 0.0
        %274 = vmatpush1.msra.mxu0 0.0
        %275 = vmatprep.subr.mxu0 0.0
        %276 = vmatpush1.msra.mxu0 0.0
        %277 = vmatprep.subr.mxu0 0.0
        %278 = vmatpush1.msra.mxu0 0.0
        %279 = vmatprep.subr.mxu0 0.0
        %280 = vmatpush1.msra.mxu0 0.0
        %281 = vmatprep.subr.mxu0 0.0
        %282 = vmatpush1.msra.mxu0 0.0
        %283 = vmatprep.subr.mxu0 0.0
        %284 = vmatpush1.msra.mxu0 0.0
        %285 = vmatprep.subr.mxu0 0.0
        %286 = vmatpush1.msra.mxu0 0.0
        %287 = vmatprep.subr.mxu0 0.0
        %288 = vmatpush1.msra.mxu0 0.0
        %289 = vmatprep.subr.mxu0 0.0
        %290 = vmatpush1.msra.mxu0 0.0
        %291 = vmatprep.subr.mxu0 0.0
        %292 = vmatpush1.msra.mxu0 0.0
        %293 = vmatprep.subr.mxu0 0.0
        %294 = vmatpush1.msra.mxu0 0.0
        %295 = vmatprep.subr.mxu0 0.0
        %296 = vmatpush1.msra.mxu0 0.0
        %297 = vmatprep.subr.mxu0 0.0
        %298 = vmatpush1.msra.mxu0 0.0
        %299 = vmatprep.subr.mxu0 0.0
        %300 = vmatpush1.msra.mxu0 0.0
        %301 = vmatprep.subr.mxu0 0.0
        %302 = vmatpush1.msra.mxu0 0.0
        %303 = vmatprep.subr.mxu0 0.0
        %304 = vmatpush1.msra.mxu0 0.0
        %305 = vmatprep.subr.mxu0 0.0
        %306 = vmatpush1.msra.mxu0 0.0
        %307 = vmatprep.subr.mxu0 0.0
        %308 = vmatpush1.msra.mxu0 0.0
        %309 = vmatprep.subr.mxu0 0.0
        %310 = vmatpush1.msra.mxu0 0.0
        %311 = vmatprep.subr.mxu0 0.0
        %312 = vmatpush1.msra.mxu0 0.0
        %313 = vmatprep.subr.mxu0 0.0
        %314 = vmatpush1.msra.mxu0 0.0
        %315 = vmatprep.mubr.f32.mxu0 0.0
        %316 = vmatmul.mubr.f32.gmra.mrb[0].mxu0 %v249
        %v317 = vpop.f32.mrb[0].mxu0
        %v318 = vadd.f32 0.0, %v317
        %v319 = vpop.f32.mrb[0].mxu0
        %320 = vdwg.mxu0
        %v321 = vmax.f32 %v318, 0.0
        %v322 = vld [vmem:[%s2] sm:$0x3]
        %vm323 = vcmask 15360
        %v325 = vsel %vm323, %v321, 0
        %vm327 = vcmask 1041408
        %v329 = vsel %vm327, %v322, 0
        %331 = vmatprep.subr.mxu0 0.0
        %332 = vmatpush1.msra.mxu0 %v329
        %333 = vmatprep.subr.mxu0 0.0
        %334 = vmatpush1.msra.mxu0 0.0
        %335 = vmatprep.subr.mxu0 0.0
        %336 = vmatpush1.msra.mxu0 0.0
        %337 = vmatprep.subr.mxu0 0.0
        %338 = vmatpush1.msra.mxu0 0.0
        %339 = vmatprep.subr.mxu0 0.0
        %340 = vmatpush1.msra.mxu0 0.0
        %341 = vmatprep.subr.mxu0 0.0
        %342 = vmatpush1.msra.mxu0 0.0
        %343 = vmatprep.subr.mxu0 0.0
        %344 = vmatpush1.msra.mxu0 0.0
        %345 = vmatprep.subr.mxu0 0.0
        %346 = vmatpush1.msra.mxu0 0.0
        %347 = vmatprep.subr.mxu0 0.0
        %348 = vmatpush1.msra.mxu0 0.0
        %349 = vmatprep.subr.mxu0 0.0
        %350 = vmatpush1.msra.mxu0 0.0
        %351 = vmatprep.subr.mxu0 0.0
        %352 = vmatpush1.msra.mxu0 0.0
        %353 = vmatprep.subr.mxu0 0.0
        %354 = vmatpush1.msra.mxu0 0.0
        %355 = vmatprep.subr.mxu0 0.0
        %356 = vmatpush1.msra.mxu0 0.0
        %357 = vmatprep.subr.mxu0 0.0
        %358 = vmatpush1.msra.mxu0 0.0
        %359 = vmatprep.subr.mxu0 0.0
        %360 = vmatpush1.msra.mxu0 0.0
        %361 = vmatprep.subr.mxu0 0.0
        %362 = vmatpush1.msra.mxu0 0.0
        %363 = vmatprep.subr.mxu0 0.0
        %364 = vmatpush1.msra.mxu0 0.0
        %365 = vmatprep.subr.mxu0 0.0
        %366 = vmatpush1.msra.mxu0 0.0
        %367 = vmatprep.subr.mxu0 0.0
        %368 = vmatpush1.msra.mxu0 0.0
        %369 = vmatprep.subr.mxu0 0.0
        %370 = vmatpush1.msra.mxu0 0.0
        %371 = vmatprep.subr.mxu0 0.0
        %372 = vmatpush1.msra.mxu0 0.0
        %373 = vmatprep.subr.mxu0 0.0
        %374 = vmatpush1.msra.mxu0 0.0
        %375 = vmatprep.subr.mxu0 0.0
        %376 = vmatpush1.msra.mxu0 0.0
        %377 = vmatprep.subr.mxu0 0.0
        %378 = vmatpush1.msra.mxu0 0.0
        %379 = vmatprep.subr.mxu0 0.0
        %380 = vmatpush1.msra.mxu0 0.0
        %381 = vmatprep.subr.mxu0 0.0
        %382 = vmatpush1.msra.mxu0 0.0
        %383 = vmatprep.subr.mxu0 0.0
        %384 = vmatpush1.msra.mxu0 0.0
        %385 = vmatprep.subr.mxu0 0.0
        %386 = vmatpush1.msra.mxu0 0.0
        %387 = vmatprep.subr.mxu0 0.0
        %388 = vmatpush1.msra.mxu0 0.0
        %389 = vmatprep.subr.mxu0 0.0
        %390 = vmatpush1.msra.mxu0 0.0
        %391 = vmatprep.subr.mxu0 0.0
        %392 = vmatpush1.msra.mxu0 0.0
        %393 = vmatprep.subr.mxu0 0.0
        %394 = vmatpush1.msra.mxu0 0.0
        %395 = vmatprep.mubr.f32.mxu0 0.0
        %396 = vmatmul.mubr.f32.gmra.mrb[0].mxu0 %v325
        %v397 = vpop.f32.mrb[0].mxu0
        %v398 = vadd.f32 0.0, %v397
        %v399 = vpop.f32.mrb[0].mxu0
        %400 = vdwg.mxu0
        %v401 = vadd.f32 %v398, %v398
        %v402 = vxor.u32 %v401, 2147483648
        %v403 = vmul.f32 %v402, 1.442695
        %v404 = vpow.pop %v403
        %v405 = vadd.f32 %v404, 1.0
        %v406 = vrcp.pop %v405
        %v407 = vmul.f32 1.0, %v406
        %v408 = vlaneseq
        %v409 = vshrl.u32 %v408, 7
        %v410 = vsub.s32 0, %v409
        %v411 = vrot.slane %v407, %v410
        %413 = vbcast.lane.b32.xlu0 %v411, 256
        %v414 = vpop.permute.xlu0 %413
        %s416 = sor.u32 256, 8
        %417 = vbcast.lane.b32.xlu0 %v411, %s416
        %v418 = vpop.permute.xlu0 %417
        %s420 = sor.u32 256, 16
        %421 = vbcast.lane.b32.xlu0 %v411, %s420
        %v422 = vpop.permute.xlu0 %421
        %s424 = sor.u32 256, 24
        %425 = vbcast.lane.b32.xlu0 %v411, %s424
        %v426 = vpop.permute.xlu0 %425
        %v427 = vmul.f32 %v189, %v414
        %v428 = vmul.f32 %v190, %v414
        %v429 = vmul.f32 %v191, %v418
        %v430 = vmul.f32 %v192, %v418
        %v431 = vmul.f32 %v193, %v422
        %v432 = vmul.f32 %v194, %v422
        %v433 = vmul.f32 %v195, %v426
        %v434 = vmul.f32 %v196, %v426
        %435 = vst [vmem:[%s188] sm:$0xff] %v427
        %436 = vst [vmem:[%s188 + $0x8] sm:$0xff] %v428
        %437 = vst [vmem:[%s188 + $0x10] sm:$0xff] %v429
        %438 = vst [vmem:[%s188 + $0x18] sm:$0xff] %v430
        %439 = vst [vmem:[%s188 + $0x20] sm:$0xff] %v431
        %440 = vst [vmem:[%s188 + $0x28] sm:$0xff] %v432
        %441 = vst [vmem:[%s188 + $0x30] sm:$0xff] %v433
        %442 = vst [vmem:[%s188 + $0x38] sm:$0xff] %v434
        %s443 = sand.u32 %s96, 1
        %s444 = scalar_lea.sflag [#allocation4], %s443
        %s445 = sand.u32 %s96, 1
        %s446 = smul.addr %s445, 64
        %s447 = scalar_lea.vmem [#allocation5], %s446
        // Predicated region
        $region37: #{tpu_custom_call.1} parent=31 // pred_check
          %p448 = pneg %p106
        $region38: #{tpu_custom_call.1} parent=31 // pred_check_branch
          %450 = sbr.rel (%p448) target = $region40
        $region39: #{tpu_custom_call.1} parent=31 // pred_region
          %s452 = ssub.s32 1024, 1024
          %453 = vsyncadd %s444, %s452
          %s454 = smul.addr %s20, 8
          %s455 = smul.addr %s454, 128
          %s456 = scalar_lea.hbm %s3, %s455
          %s457 = sshll.u32 %s447, 4
          %s458 = int_to_ptr.vmem [resolvable:$true] %s457
          %463 = dma.vmem_to_hbm [thread:$0]  %s458, 1024, %s456, %s444, 256, 256, 16
        $region40: #{tpu_custom_call.1} parent=31 // pred_fallthru
          _
      $region32: #{tpu_custom_call.1} parent=5 // pred_fallthru
        _
      %p464 = scmp.le.s32.totalorder 2, %s15
      // Predicated region
      $region41: #{tpu_custom_call.1} parent=5 // pred_check
        %p465 = pneg %p464
      $region42: #{tpu_custom_call.1} parent=5 // pred_check_branch
        %467 = sbr.rel (%p465) target = $region44
      $region43: #{tpu_custom_call.1} parent=5 // pred_region
        %s468 = ssub.s32 %s15, 2
        // Predicated region
        $region45: #{tpu_custom_call.1} parent=43 // pred_check
          %p469 = pneg %p112
        $region46: #{tpu_custom_call.1} parent=43 // pred_check_branch
          %471 = sbr.rel (%p469) target = $region48
        $region47: #{tpu_custom_call.1} parent=43 // pred_region
          %s472 = sand.u32 %s97, 1
          %s473 = scalar_lea.sflag [#allocation4], %s472
          %s474 = sand.u32 %s97, 1
          %s475 = smul.addr %s474, 64
          %s476 = scalar_lea.vmem [#allocation5], %s475
          %477 = dma.done %s473, 1024
        $region48: #{tpu_custom_call.1} parent=43 // pred_fallthru
          _
      $region44: #{tpu_custom_call.1} parent=5 // pred_fallthru
        _
    $region6: #{tpu_custom_call.1} parent=1 // loop_footer
      %s19 = sadd.s32 1, %s15
    $region7: #{tpu_custom_call.1} parent=1 // loop_footer_branch
      %14 = sbr.rel target = $region3
    $region8: #{tpu_custom_call.1} parent=1 // loop_exit
      _
    %478 = vsyncpa [#allocation3], 1
    %s479 = scalar_lea.sflag [#allocation3], 1
    %480 = vsyncpa %s479, 1
    %481 = vsyncpa [#allocation4], 1
    %s482 = scalar_lea.sflag [#allocation4], 1
    %483 = vsyncpa %s482, 1

</llo_original>
